<compile_context>
chip_gen: v7x
topology: tpu7x:2x2x1
jax: 0.10.0
libtpu: 0.0.40
codegen_flags: <defaults>
</compile_context>

<pallas_src>
import functools
import math

import jax
import jax.numpy as jnp
from jax.experimental import pallas as pl
from jax.experimental.pallas import tpu as pltpu


# ---------------------------------------------------------------------------
# Phase A.1: gridded global sum-pool:  x2 [BC, HW] -> sums [BC, 1] (f32)
# Grid = (row tiles, spatial tiles); spatial axis is the reduction -> last,
# "arbitrary"; output block is resident across it (accumulator pattern).
# ---------------------------------------------------------------------------
def _pool_kernel(x_ref, sum_ref, *, hw, lane_tile):
    j = pl.program_id(1)

    @pl.when(j == 0)
    def _():
        sum_ref[...] = jnp.zeros_like(sum_ref)

    x = x_ref[...].astype(jnp.float32)
    if hw % lane_tile != 0:
        # Last spatial block is padded; mask lanes past the true extent.
        col = jax.lax.broadcasted_iota(jnp.int32, x.shape, 1) + j * lane_tile
        x = jnp.where(col < hw, x, 0.0)
    sum_ref[...] += jnp.sum(x, axis=-1, keepdims=True)


# ---------------------------------------------------------------------------
# Phase A.2: tiny gate math (whole arrays in VMEM; a few KiB total).
#   pooled [B, C] (sums; 1/HW folded into w1) -> gates [B, C] (f32)
# ---------------------------------------------------------------------------
def _gate_kernel(p_ref, w1_ref, b1_ref, w2_ref, b2_ref, g_ref):
    y1 = jnp.dot(p_ref[...], w1_ref[...], preferred_element_type=jnp.float32)
    y1 = jnp.maximum(y1 + b1_ref[...], 0.0)                    # [B, R]
    y2 = jnp.dot(y1, w2_ref[...], preferred_element_type=jnp.float32)
    g_ref[...] = jnp.tanh(y2 + b2_ref[...])                    # [B, C]


# ---------------------------------------------------------------------------
# Phase B: memory-bound scale pass:  out = x * gate  (gate broadcast over HW)
# ---------------------------------------------------------------------------
def _scale_kernel(x_ref, g_ref, o_ref):
    # Keep the big tensor in its native dtype; cast the tiny gate column once.
    o_ref[...] = x_ref[...] * g_ref[...].astype(x_ref.dtype)


def _pick_tiles(bc, hw, itemsize):
    """Block sizes: lane-dense last dim, and per-block bytes small enough that
    double-buffered in+out blocks fit the smallest default scoped VMEM (v5e)."""
    lane_tile = hw if hw <= 512 else 512              # 512 is a multiple of 128
    max_rows = max(8, (1 << 20) // (lane_tile * itemsize))   # ~1 MiB / x block
    max_rows = (max_rows // 8) * 8                    # sublane alignment
    row_tile = bc if bc <= max_rows else max_rows
    return row_tile, lane_tile


def se_block(x, w1, b1, w2, b2):
    """x: [B, C, H, W] (NCHW). w1: [R, C], b1: [R], w2: [C, R], b2: [C]
    (torch nn.Linear layout)."""
    B, C, H, W = x.shape
    R = w1.shape[0]
    HW = H * W
    BC = B * C

    x2 = x.reshape(BC, HW)                 # contiguous view of NCHW, no transpose
    row_tile, lane_tile = _pick_tiles(BC, HW, x.dtype.itemsize)
    grid = (pl.cdiv(BC, row_tile), pl.cdiv(HW, lane_tile))

    # ---- Phase A.1: spatial sum (gridded, pipelined) ------------------------
    sums = pl.pallas_call(
        functools.partial(_pool_kernel, hw=HW, lane_tile=lane_tile),
        out_shape=jax.ShapeDtypeStruct((BC, 1), jnp.float32),
        grid=grid,
        in_specs=[pl.BlockSpec((row_tile, lane_tile), lambda i, j: (i, j))],
        out_specs=pl.BlockSpec((row_tile, 1), lambda i, j: (i, 0)),
        compiler_params=pltpu.CompilerParams(
            dimension_semantics=("parallel", "arbitrary")),
        cost_estimate=pl.CostEstimate(
            flops=BC * HW, transcendentals=0,
            bytes_accessed=BC * HW * x.dtype.itemsize + BC * 4),
    )(x2)

    # ---- Phase A.2: gates = tanh(fc2(relu(fc1(mean)))) ----------------------
    # Fold the 1/HW of the mean pool into fc1's weight (upstream is sum-pool).
    w1t = (jnp.transpose(w1).astype(jnp.float32) / float(HW))   # [C, R]
    w2t = jnp.transpose(w2).astype(jnp.float32)                 # [R, C]
    b1r = b1.reshape(1, R).astype(jnp.float32)
    b2r = b2.reshape(1, C).astype(jnp.float32)
    pooled = sums.reshape(B, C)

    gates = pl.pallas_call(
        _gate_kernel,
        out_shape=jax.ShapeDtypeStruct((B, C), jnp.float32),
        in_specs=[pl.BlockSpec(memory_space=pltpu.MemorySpace.VMEM)] * 5,
        out_specs=pl.BlockSpec(memory_space=pltpu.MemorySpace.VMEM),
    )(pooled, w1t, b1r, w2t, b2r)

    # ---- Phase B: out = x * gates (gridded, lane-dense, pipelined) ----------
    gates_col = gates.reshape(BC, 1)
    out2 = pl.pallas_call(
        _scale_kernel,
        out_shape=jax.ShapeDtypeStruct((BC, HW), x.dtype),
        grid=grid,
        in_specs=[pl.BlockSpec((row_tile, lane_tile), lambda i, j: (i, j)),
                  pl.BlockSpec((row_tile, 1), lambda i, j: (i, 0))],
        out_specs=pl.BlockSpec((row_tile, lane_tile), lambda i, j: (i, j)),
        compiler_params=pltpu.CompilerParams(
            dimension_semantics=("parallel", "parallel")),
        cost_estimate=pl.CostEstimate(
            flops=BC * HW, transcendentals=0,
            bytes_accessed=2 * BC * HW * x.dtype.itemsize + BC * 4),
    )(x2, gates_col)

    return out2.reshape(B, C, H, W)


def init_params(key, input_channels, reduction_ratio=16):
    """Deterministic kaiming_uniform (fan_in, relu gain) init, zero biases."""
    reduced = input_channels // reduction_ratio
    k1, k2 = jax.random.split(key)

    def kaiming_uniform(k, out_f, in_f):
        gain = math.sqrt(2.0)                      # nonlinearity='relu'
        bound = gain * math.sqrt(3.0 / in_f)       # fan_in mode
        return jax.random.uniform(k, (out_f, in_f), jnp.float32, -bound, bound)

    w1 = kaiming_uniform(k1, reduced, input_channels)      # fc1.weight: [R, C]
    b1 = jnp.zeros((reduced,), jnp.float32)                 # fc1.bias
    w2 = kaiming_uniform(k2, input_channels, reduced)      # fc2.weight: [C, R]
    b2 = jnp.zeros((input_channels,), jnp.float32)          # fc2.bias
    return w1, b1, w2, b2


def se_block_ref(x, w1, b1, w2, b2):
    """Pure-JAX reference mirroring the PyTorch forward."""
    y = jnp.mean(x, axis=(2, 3))                            # [B, C]
    y = jnp.maximum(y @ w1.T + b1, 0.0)                     # [B, R]
    y = jnp.tanh(y @ w2.T + b2)                             # [B, C]
    return x * y[:, :, None, None]


if __name__ == "__main__":
    key = jax.random.PRNGKey(0)
    kx, kp = jax.random.split(key)

    B, C, H, W = 2, 32, 16, 16        # C must be >= reduction_ratio (16)
    x = jax.random.normal(kx, (B, C, H, W), jnp.float32)
    w1, b1, w2, b2 = init_params(kp, C, reduction_ratio=16)

    out = se_block(x, w1, b1, w2, b2)
    out = jax.block_until_ready(out)

    ref = se_block_ref(x, w1, b1, w2, b2)
    assert out.shape == (B, C, H, W)
    assert jnp.allclose(out, ref, atol=1e-5, rtol=1e-5), "mismatch vs reference"

    print("KERNEL_OK")
</pallas_src>

<mosaic_0001>
module attributes {stable_mosaic.version = 11 : i64} {
  func.func @_pool_kernel(%arg0: i32, %arg1: i32, %arg2: memref<64x256xf32, #tpu.memory_space<vmem>>, %arg3: memref<64x1xf32, #tpu.memory_space<vmem>>) attributes {dimension_semantics = [#tpu.dimension_semantics<parallel>, #tpu.dimension_semantics<arbitrary>], iteration_bounds = array<i64: 1, 1>, scalar_prefetch = 0 : i64, scratch_operands = 0 : i64, tpu.core_type = #tpu.core_type<tc>, window_params = [{transform_indices = @transform_0, window_bounds = array<i64: 64, 256>}, {transform_indices = @transform_1, window_bounds = array<i64: 64, 1>}]} {
    %c0_i32 = arith.constant 0 : i32
    %0 = arith.cmpi eq, %arg1, %c0_i32 : i32
    %1 = arith.extui %0 : i1 to i32
    %c0_i32_0 = arith.constant 0 : i32
    %2 = arith.cmpi ne, %1, %c0_i32_0 : i32
    scf.if %2 {
      %cst_6 = arith.constant 0.000000e+00 : f32
      %9 = vector.broadcast %cst_6 : f32 to vector<64x1xf32>
      %c0_7 = arith.constant 0 : index
      %c0_8 = arith.constant 0 : index
      %10 = vector.load %arg3[%c0_7, %c0_8] : memref<64x1xf32, #tpu.memory_space<vmem>>, vector<64x1xf32>
      tpu.vector_store %arg3[%c0_7, %c0_8], %9 {strides = array<i32>} : memref<64x1xf32, #tpu.memory_space<vmem>>, vector<64x1xf32>,
    } else {
    }
    %c0 = arith.constant 0 : index
    %c0_1 = arith.constant 0 : index
    %3 = vector.load %arg2[%c0, %c0_1] : memref<64x256xf32, #tpu.memory_space<vmem>>, vector<64x256xf32>
    %c0_2 = arith.constant 0 : index
    %c0_3 = arith.constant 0 : index
    %4 = vector.load %arg3[%c0_2, %c0_3] : memref<64x1xf32, #tpu.memory_space<vmem>>, vector<64x1xf32>
    %cst = arith.constant dense<0.000000e+00> : vector<64xf32>
    %5 = vector.multi_reduction <add>, %3, %cst [1] : vector<64x256xf32> to vector<64xf32>
    %6 = vector.shape_cast %5 : vector<64xf32> to vector<64x1xf32>
    %7 = arith.addf %4, %6 : vector<64x1xf32>
    %c0_4 = arith.constant 0 : index
    %c0_5 = arith.constant 0 : index
    %8 = vector.load %arg3[%c0_4, %c0_5] : memref<64x1xf32, #tpu.memory_space<vmem>>, vector<64x1xf32>
    tpu.vector_store %arg3[%c0_4, %c0_5], %7 {strides = array<i32>} : memref<64x1xf32, #tpu.memory_space<vmem>>, vector<64x1xf32>,
    return
  }
  func.func @transform_0(%arg0: i32, %arg1: i32) -> (i32, i32) {
    %c0_i32 = arith.constant 0 : i32
    return %arg0, %arg1 : i32, i32
  }
  func.func @transform_1(%arg0: i32, %arg1: i32) -> (i32, i32) {
    %c0_i32 = arith.constant 0 : i32
    %c0_i32_0 = arith.constant 0 : i32
    return %arg0, %c0_i32 : i32, i32
  }
}

</mosaic_0001>

<llo_original>
// kernel: tpu_custom_call.1
$region0: #{tpu_custom_call.1}
  #allocation0 [shape = 'u32[]', space=smem, size = 0x4, offset = 0x4, fixed_abs, tag = 'smem constant byte address 0x4 - core index']
  #allocation1 [shape = 'u32[144,128]{1,0:T(1,128)}', space=vmem, size = 0x12000, scoped, tag = 'internal scratch']
  %s0 = inlined_call_operand.hbm [shape: f32[64,256], index: 0, kind: input, shape index: {}]
  %s1 = inlined_call_operand.vmem [shape: f32[64,1], index: 1, kind: output, shape index: {}]
  %s2 = sld [smem:[#allocation0]]
  $region22: #{tpu_custom_call.1} parent=0
    _
  %s4 = ssub.s32 1, %s2
  %s5 = scalar_select 0, %s4, %s2
  $region1: #{tpu_custom_call.1} parent=0
    #allocation2 [shape = 'u8[65536]{0}', space=vmem, size = 0x10000, scoped, tag = 'input window, operand 0, single buffered']
    #allocation3 [shape = 's32[1]{0}', space=sflag, size = 0x4, scoped, tag = 'scoped memory for tpu_custom_call.1']
    %6 = vsyncpa [#allocation3], 0
    // Predicated region
    $region2: #{tpu_custom_call.1} parent=1 // pred_check
      _
    $region3: #{tpu_custom_call.1} parent=1 // pred_check_branch
      %8 = sbr.rel (0) target = $region5
    $region4: #{tpu_custom_call.1} parent=1 // pred_region
      %s10 = ssub.s32 2048, 2048
      %11 = vsyncadd [#allocation3], %s10
      %s12 = sshll.u32 [#allocation2], 4
      %s13 = int_to_ptr.vmem [resolvable:$true] %s12
      %18 = dma.hbm_to_vmem [thread:$0]  %s0, 2048, %s13, [#allocation3], 256, 256, 16
    $region5: #{tpu_custom_call.1} parent=1 // pred_fallthru
      _
    // Predicated region
    $region6: #{tpu_custom_call.1} parent=1 // pred_check
      _
    $region7: #{tpu_custom_call.1} parent=1 // pred_check_branch
      %20 = sbr.rel (0) target = $region9
    $region8: #{tpu_custom_call.1} parent=1 // pred_region
      %21 = dma.done [#allocation3], 2048
    $region9: #{tpu_custom_call.1} parent=1 // pred_fallthru
      _
    %p22 = scmp.eq.s32.totalorder 0, 0
    // Predicated region
    $region10: #{tpu_custom_call.1} parent=1 // pred_check
      %p23 = pneg %p22
    $region11: #{tpu_custom_call.1} parent=1 // pred_check_branch
      %25 = sbr.rel (%p23) target = $region13
    $region12: #{tpu_custom_call.1} parent=1 // pred_region
      %vm26 = vcmask 7168
      %27 = vst.msk [vmem:[%s1] sm:$0xff] %vm26, 0.0
      %28 = vst.msk [vmem:[%s1 + $0x8] sm:$0xff] %vm26, 0.0
      %29 = vst.msk [vmem:[%s1 + $0x10] sm:$0xff] %vm26, 0.0
      %30 = vst.msk [vmem:[%s1 + $0x18] sm:$0xff] %vm26, 0.0
      %31 = vst.msk [vmem:[%s1 + $0x20] sm:$0xff] %vm26, 0.0
      %32 = vst.msk [vmem:[%s1 + $0x28] sm:$0xff] %vm26, 0.0
      %33 = vst.msk [vmem:[%s1 + $0x30] sm:$0xff] %vm26, 0.0
      %34 = vst.msk [vmem:[%s1 + $0x38] sm:$0xff] %vm26, 0.0
    $region13: #{tpu_custom_call.1} parent=1 // pred_fallthru
      _
    %v35 = vld [vmem:[#allocation2] sm:$0xff]
    %v36 = vld [vmem:[#allocation2 + $0x8] sm:$0xff]
    %v37 = vld [vmem:[#allocation2 + $0x10] sm:$0xff]
    %v38 = vld [vmem:[#allocation2 + $0x18] sm:$0xff]
    %v39 = vld [vmem:[#allocation2 + $0x20] sm:$0xff]
    %v40 = vld [vmem:[#allocation2 + $0x28] sm:$0xff]
    %v41 = vld [vmem:[#allocation2 + $0x30] sm:$0xff]
    %v42 = vld [vmem:[#allocation2 + $0x38] sm:$0xff]
    %v43 = vld [vmem:[#allocation2 + $0x40] sm:$0xff]
    %v44 = vld [vmem:[#allocation2 + $0x48] sm:$0xff]
    %v45 = vld [vmem:[#allocation2 + $0x50] sm:$0xff]
    %v46 = vld [vmem:[#allocation2 + $0x58] sm:$0xff]
    %v47 = vld [vmem:[#allocation2 + $0x60] sm:$0xff]
    %v48 = vld [vmem:[#allocation2 + $0x68] sm:$0xff]
    %v49 = vld [vmem:[#allocation2 + $0x70] sm:$0xff]
    %v50 = vld [vmem:[#allocation2 + $0x78] sm:$0xff]
    %v51 = vld [vmem:[%s1] sm:$0xff]
    %v52 = vld [vmem:[%s1 + $0x8] sm:$0xff]
    %v53 = vld [vmem:[%s1 + $0x10] sm:$0xff]
    %v54 = vld [vmem:[%s1 + $0x18] sm:$0xff]
    %v55 = vld [vmem:[%s1 + $0x20] sm:$0xff]
    %v56 = vld [vmem:[%s1 + $0x28] sm:$0xff]
    %v57 = vld [vmem:[%s1 + $0x30] sm:$0xff]
    %v58 = vld [vmem:[%s1 + $0x38] sm:$0xff]
    %v59 = vadd.f32 %v35, %v36
    %60 = vadd.xlane.f32.xlu0 %v59
    %v61 = vpop.xlane.xlu0 %60
    %v62 = vadd.f32 %v37, %v38
    %63 = vadd.xlane.f32.xlu0 %v62
    %v64 = vpop.xlane.xlu0 %63
    %v65 = vadd.f32 %v39, %v40
    %66 = vadd.xlane.f32.xlu0 %v65
    %v67 = vpop.xlane.xlu0 %66
    %v68 = vadd.f32 %v41, %v42
    %69 = vadd.xlane.f32.xlu0 %v68
    %v70 = vpop.xlane.xlu0 %69
    %v71 = vadd.f32 %v43, %v44
    %72 = vadd.xlane.f32.xlu0 %v71
    %v73 = vpop.xlane.xlu0 %72
    %v74 = vadd.f32 %v45, %v46
    %75 = vadd.xlane.f32.xlu0 %v74
    %v76 = vpop.xlane.xlu0 %75
    %v77 = vadd.f32 %v47, %v48
    %78 = vadd.xlane.f32.xlu0 %v77
    %v79 = vpop.xlane.xlu0 %78
    %v80 = vadd.f32 %v49, %v50
    %81 = vadd.xlane.f32.xlu0 %v80
    %v82 = vpop.xlane.xlu0 %81
    %v83 = vadd.f32 %v51, %v61
    %v84 = vadd.f32 %v52, %v64
    %v85 = vadd.f32 %v53, %v67
    %v86 = vadd.f32 %v54, %v70
    %v87 = vadd.f32 %v55, %v73
    %v88 = vadd.f32 %v56, %v76
    %v89 = vadd.f32 %v57, %v79
    %v90 = vadd.f32 %v58, %v82
    %vm91 = vcmask 7168
    %92 = vst.msk [vmem:[%s1] sm:$0xff] %vm91, %v83
    %93 = vst.msk [vmem:[%s1 + $0x8] sm:$0xff] %vm91, %v84
    %94 = vst.msk [vmem:[%s1 + $0x10] sm:$0xff] %vm91, %v85
    %95 = vst.msk [vmem:[%s1 + $0x18] sm:$0xff] %vm91, %v86
    %96 = vst.msk [vmem:[%s1 + $0x20] sm:$0xff] %vm91, %v87
    %97 = vst.msk [vmem:[%s1 + $0x28] sm:$0xff] %vm91, %v88
    %98 = vst.msk [vmem:[%s1 + $0x30] sm:$0xff] %vm91, %v89
    %99 = vst.msk [vmem:[%s1 + $0x38] sm:$0xff] %vm91, %v90
    // Predicated region
    $region14: #{tpu_custom_call.1} parent=1 // pred_check
      _
    $region15: #{tpu_custom_call.1} parent=1 // pred_check_branch
      %101 = sbr.rel (0) target = $region17
    $region16: #{tpu_custom_call.1} parent=1 // pred_region
      _
    $region17: #{tpu_custom_call.1} parent=1 // pred_fallthru
      _
    // Predicated region
    $region18: #{tpu_custom_call.1} parent=1 // pred_check
      _
    $region19: #{tpu_custom_call.1} parent=1 // pred_check_branch
      %103 = sbr.rel (0) target = $region21
    $region20: #{tpu_custom_call.1} parent=1 // pred_region
      _
    $region21: #{tpu_custom_call.1} parent=1 // pred_fallthru
      _
    %104 = vsyncpa [#allocation3], 1

</llo_original>
